<compile_context>
chip_gen: v6e
topology: v6e:2x2x1
jax: 0.10.0
libtpu: 0.0.40
codegen_flags: <defaults>
</compile_context>

<pallas_src>
import math

import jax
import jax.numpy as jnp
from jax.experimental import pallas as pl
from jax.experimental.pallas import tpu as pltpu


_SQRT_2_OVER_PI = math.sqrt(2.0 / math.pi)
_LANE = 128


def _gelu_tanh(x):
    # tanh-approximate GELU (EUP tanh).
    # TODO(synk): torch's default nn.GELU() uses the exact erf form (diff ~1e-3).
    return 0.5 * x * (1.0 + jnp.tanh(_SQRT_2_OVER_PI * (x + 0.044715 * x * x * x)))


def _vmem_capacity_bytes():
    """Physical per-core VMEM; falls back to the smallest generation (v7x, 64 MiB)."""
    try:
        cap = getattr(pltpu.get_tpu_info(), "vmem_capacity_bytes", None)
        if cap:
            return int(cap)
    except Exception:
        pass
    return 64 * 1024 * 1024


def _vmem_limit_bytes(footprint, cap):
    """Explicit scoped-VMEM limit: computed footprint + headroom, within physical."""
    want = max(int(1.2 * footprint) + (4 << 20), 32 << 20)
    return int(min(want, min(int(0.95 * cap), 128 << 20)))


def _joint_kernel(a_ref, b_ref, wa_ref, wb_ref, bias_ref, o_ref):
    # a_ref: (Bt*S_a, dim_a)   b_ref: (Bt*S_b, dim_b)   (compute dtype, e.g. bf16)
    # wa_ref: (dim_a, Dt)      wb_ref: (dim_b, Dt)      bias_ref: (1, Dt) f32
    # o_ref: (Bt, S_a + S_b, Dt)
    bt, s_out, dt = o_ref.shape
    s_a = a_ref.shape[0] // bt
    s_b = s_out - s_a

    bias = bias_ref[...]                                           # (1, Dt) f32
    ya = jnp.dot(a_ref[...], wa_ref[...], preferred_element_type=jnp.float32) + bias
    yb = jnp.dot(b_ref[...], wb_ref[...], preferred_element_type=jnp.float32) + bias

    # On this path S_a/S_b are sublane-aligned, so these value reshapes are
    # layout-free and both stores start on a tile boundary (unmasked vst).
    o_ref[:, :s_a, :] = _gelu_tanh(ya).reshape(bt, s_a, dt).astype(o_ref.dtype)
    o_ref[:, s_a:, :] = _gelu_tanh(yb).reshape(bt, s_b, dt).astype(o_ref.dtype)


def _linear_gelu_kernel(x_ref, w_ref, bias_ref, o_ref):
    # x_ref: (Rt, K)  w_ref: (K, Dt)  bias_ref: (1, Dt) f32  o_ref: (Rt, Dt)
    y = jnp.dot(x_ref[...], w_ref[...], preferred_element_type=jnp.float32) + bias_ref[...]
    o_ref[...] = _gelu_tanh(y).astype(o_ref.dtype)


def _linear_gelu(x2, w, bias2, out_dtype, block_d, cap):
    """Fallback path: dense row-blocked GELU(x @ w + bias); always tile-aligned."""
    rows, k = x2.shape
    d_pad = w.shape[1]
    in_bytes = jnp.dtype(x2.dtype).itemsize
    out_bytes = jnp.dtype(out_dtype).itemsize
    budget = int(0.6 * cap)

    if block_d is None:
        block_d = min(d_pad, 512)

    per_row = (2 * k * in_bytes            # double-buffered input rows
               + 2 * block_d * out_bytes   # double-buffered output rows
               + 2 * block_d * 4)          # f32 matmul/GELU intermediates
    fixed = 2 * (k * block_d * in_bytes + block_d * 4)
    block_r = int(max(8, (budget - fixed) // max(per_row, 1)))
    if block_r >= rows:
        block_r = rows                              # single full row block: always legal
    else:
        block_r = max(16, (block_r // 16) * 16)     # sublane-aligned for f32 and bf16
    footprint = fixed + block_r * per_row

    grid = (pl.cdiv(rows, block_r), pl.cdiv(d_pad, block_d))
    cost = pl.CostEstimate(
        flops=2 * rows * k * d_pad,
        transcendentals=rows * d_pad,
        bytes_accessed=(rows * k * in_bytes + k * d_pad * in_bytes + d_pad * 4
                        + rows * d_pad * out_bytes),
    )
    return pl.pallas_call(
        _linear_gelu_kernel,
        out_shape=jax.ShapeDtypeStruct((rows, d_pad), out_dtype),
        grid_spec=pltpu.PrefetchScalarGridSpec(
            num_scalar_prefetch=0,
            grid=grid,
            in_specs=[
                pl.BlockSpec((block_r, k), lambda i, j: (i, 0)),
                pl.BlockSpec((k, block_d), lambda i, j: (0, j)),
                pl.BlockSpec((1, block_d), lambda i, j: (0, j)),
            ],
            out_specs=pl.BlockSpec((block_r, block_d), lambda i, j: (i, j)),
        ),
        compiler_params=pltpu.CompilerParams(
            dimension_semantics=("parallel", "parallel"),
            vmem_limit_bytes=_vmem_limit_bytes(footprint, cap)),
        cost_estimate=cost,
    )(x2, w, bias2)


def feature_joint(feature_a, feature_b, weight, bias, *,
                  block_b=None, block_d=None, compute_dtype=jnp.bfloat16):
    """out = GELU(cat([cat([a,0],-1), cat([0,b],-1)], 1) @ weight + bias).

    weight: (dim_a + dim_b, out_dim)  -- i.e. torch Linear.weight transposed.
    bias:   (out_dim,)
    compute_dtype: MXU input dtype (None -> keep input dtype).
    Dropout is inference-mode (identity).
    """
    B, s_a, dim_a = feature_a.shape
    Bb, s_b, dim_b = feature_b.shape
    assert B == Bb
    d_out = weight.shape[1]
    assert weight.shape[0] == dim_a + dim_b

    out_dtype = feature_a.dtype
    if compute_dtype is None:
        compute_dtype = out_dtype
    in_bytes = jnp.dtype(compute_dtype).itemsize
    out_bytes = jnp.dtype(out_dtype).itemsize

    # Lane-dense output stores: pad out_dim only when it is not a lane multiple.
    d_pad = max(_LANE, ((d_out + _LANE - 1) // _LANE) * _LANE)
    if d_pad != d_out:
        weight = jnp.pad(weight, ((0, 0), (0, d_pad - d_out)))
        bias = jnp.pad(bias, ((0, d_pad - d_out),))

    # Split the weight; MXU operands in compute_dtype, f32 accumulation in-kernel.
    w_a = weight[:dim_a].astype(compute_dtype)
    w_b = weight[dim_a:].astype(compute_dtype)
    bias2 = bias.reshape(1, d_pad).astype(jnp.float32)

    # Flatten (B, S, D) -> (B*S, D) in the wrapper (metadata-only on contiguous
    # HBM) so the kernel never folds batch across the sublane axis itself.
    a2 = feature_a.reshape(B * s_a, dim_a).astype(compute_dtype)
    b2 = feature_b.reshape(B * s_b, dim_b).astype(compute_dtype)

    cap = _vmem_capacity_bytes()

    # Mid-block store-offset alignment requirement for the single-output fast path.
    sub_align = 8 * max(1, 4 // out_bytes)     # f32 -> 8 sublanes, bf16 -> 16
    aligned = (s_a % sub_align == 0) and (s_b % sub_align == 0)

    if not aligned:
        out_a = _linear_gelu(a2, w_a, bias2, out_dtype, block_d, cap)
        out_b = _linear_gelu(b2, w_b, bias2, out_dtype, block_d, cap)
        out = jnp.concatenate(
            [out_a.reshape(B, s_a, d_pad), out_b.reshape(B, s_b, d_pad)], axis=1)
        if d_pad != d_out:
            out = out[..., :d_out]
        # TODO(synk): training-mode Dropout(p=0.1) not applied (inference forward).
        return out

    s_out = s_a + s_b
    if block_d is None:
        block_d = min(d_pad, 512)

    # VMEM accounting: double-buffered input/output blocks + double-buffered
    # weight/bias column tiles + f32 matmul/GELU intermediates.
    per_b = (2 * (s_a * dim_a + s_b * dim_b) * in_bytes
             + 2 * s_out * block_d * out_bytes
             + 2 * s_out * block_d * 4)
    fixed = 2 * ((dim_a + dim_b) * block_d * in_bytes + block_d * 4)
    if block_b is None:
        budget = int(0.6 * cap)
        block_b = int(max(1, min(B, (budget - fixed) // max(per_b, 1))))
    footprint = fixed + block_b * per_b

    grid = (pl.cdiv(B, block_b), pl.cdiv(d_pad, block_d))

    cost = pl.CostEstimate(
        flops=2 * B * d_pad * (s_a * dim_a + s_b * dim_b),
        transcendentals=B * s_out * d_pad,
        bytes_accessed=(B * (s_a * dim_a + s_b * dim_b) * in_bytes
                        + (dim_a + dim_b) * d_pad * in_bytes + d_pad * 4
                        + B * s_out * d_pad * out_bytes),
    )

    grid_spec = pltpu.PrefetchScalarGridSpec(
        num_scalar_prefetch=0,
        grid=grid,
        in_specs=[
            pl.BlockSpec((block_b * s_a, dim_a), lambda i, j: (i, 0)),
            pl.BlockSpec((block_b * s_b, dim_b), lambda i, j: (i, 0)),
            pl.BlockSpec((dim_a, block_d), lambda i, j: (0, j)),   # invariant in i
            pl.BlockSpec((dim_b, block_d), lambda i, j: (0, j)),   # invariant in i
            pl.BlockSpec((1, block_d), lambda i, j: (0, j)),       # invariant in i
        ],
        out_specs=pl.BlockSpec((block_b, s_out, block_d), lambda i, j: (i, 0, j)),
    )

    out = pl.pallas_call(
        _joint_kernel,
        out_shape=jax.ShapeDtypeStruct((B, s_out, d_pad), out_dtype),
        grid_spec=grid_spec,
        compiler_params=pltpu.CompilerParams(
            dimension_semantics=("parallel", "parallel"),
            vmem_limit_bytes=_vmem_limit_bytes(footprint, cap)),
        cost_estimate=cost,
    )(a2, b2, w_a, w_b, bias2)

    if d_pad != d_out:
        out = out[..., :d_out]
    # TODO(synk): training-mode Dropout(p=0.1) not applied (eval/inference forward).
    return out


if __name__ == "__main__":
    key = jax.random.PRNGKey(0)
    k_a, k_b, k_w, k_bias = jax.random.split(key, 4)

    B, s_a, s_b = 2, 8, 8
    dim_a, dim_b, out_dim = 16, 48, 128

    feature_a = jax.random.normal(k_a, (B, s_a, dim_a), dtype=jnp.float32)
    feature_b = jax.random.normal(k_b, (B, s_b, dim_b), dtype=jnp.float32)

    # nn.Linear(dim_a + dim_b, out_dim) parameters, stored as (in, out).
    fan_in = dim_a + dim_b
    bound = 1.0 / math.sqrt(fan_in)
    weight = jax.random.uniform(k_w, (fan_in, out_dim), jnp.float32, -bound, bound)
    bias = jax.random.uniform(k_bias, (out_dim,), jnp.float32, -bound, bound)

    out = feature_joint(feature_a, feature_b, weight, bias)
    out = jax.block_until_ready(out)

    # Reference: the literal PyTorch forward (zeros + concats + linear + GELU), f32.
    zeros_a = jnp.zeros((B, s_a, dim_b), jnp.float32)
    zeros_b = jnp.zeros((B, s_b, dim_a), jnp.float32)
    fa_exp = jnp.concatenate([feature_a, zeros_a], axis=2)
    fb_exp = jnp.concatenate([zeros_b, feature_b], axis=2)
    joint = jnp.concatenate([fa_exp, fb_exp], axis=1)
    ref = _gelu_tanh(
        jnp.einsum("bsd,do->bso", joint, weight,
                   precision=jax.lax.Precision.HIGHEST) + bias)

    assert out.shape == (B, s_a + s_b, out_dim)
    # bf16 MXU operands with f32 accumulation: allow ~1e-2 drift vs the f32 reference.
    assert jnp.allclose(out, ref, atol=2e-2, rtol=2e-2)

    print("KERNEL_OK")
</pallas_src>

<mosaic_0001>
module attributes {stable_mosaic.version = 11 : i64} {
  func.func @_joint_kernel(%arg0: i32, %arg1: i32, %arg2: memref<16x16xbf16, #tpu.memory_space<vmem>>, %arg3: memref<16x48xbf16, #tpu.memory_space<vmem>>, %arg4: memref<16x128xbf16, #tpu.memory_space<vmem>>, %arg5: memref<48x128xbf16, #tpu.memory_space<vmem>>, %arg6: memref<1x128xf32, #tpu.memory_space<vmem>>, %arg7: memref<2x16x128xf32, #tpu.memory_space<vmem>>) attributes {dimension_semantics = [#tpu.dimension_semantics<parallel>, #tpu.dimension_semantics<parallel>], iteration_bounds = array<i64: 1, 1>, scalar_prefetch = 0 : i64, scratch_operands = 0 : i64, tpu.core_type = #tpu.core_type<tc>, window_params = [{transform_indices = @transform_0, window_bounds = array<i64: 16, 16>}, {transform_indices = @transform_1, window_bounds = array<i64: 16, 48>}, {transform_indices = @transform_2, window_bounds = array<i64: 16, 128>}, {transform_indices = @transform_3, window_bounds = array<i64: 48, 128>}, {transform_indices = @transform_4, window_bounds = array<i64: 1, 128>}, {transform_indices = @transform_5, window_bounds = array<i64: 2, 16, 128>}]} {
    %c0 = arith.constant 0 : index
    %c0_0 = arith.constant 0 : index
    %0 = vector.load %arg6[%c0, %c0_0] : memref<1x128xf32, #tpu.memory_space<vmem>>, vector<1x128xf32>
    %c0_1 = arith.constant 0 : index
    %c0_2 = arith.constant 0 : index
    %1 = vector.load %arg2[%c0_1, %c0_2] : memref<16x16xbf16, #tpu.memory_space<vmem>>, vector<16x16xbf16>
    %c0_3 = arith.constant 0 : index
    %c0_4 = arith.constant 0 : index
    %2 = vector.load %arg4[%c0_3, %c0_4] : memref<16x128xbf16, #tpu.memory_space<vmem>>, vector<16x128xbf16>
    %cst = arith.constant dense<0.000000e+00> : vector<16x128xf32>
    %3 = tpu.matmul %1, %2, %cst {dimension_numbers = #tpu.dot_dimension_numbers<[1], [0], [0], [1], [0, 0, 1, 1], [], []>} : vector<16x16xbf16>, vector<16x128xbf16>, vector<16x128xf32> -> vector<16x128xf32>
    %4 = vector.broadcast %0 : vector<1x128xf32> to vector<16x128xf32>
    %5 = arith.addf %3, %4 : vector<16x128xf32>
    %c0_5 = arith.constant 0 : index
    %c0_6 = arith.constant 0 : index
    %6 = vector.load %arg3[%c0_5, %c0_6] : memref<16x48xbf16, #tpu.memory_space<vmem>>, vector<16x48xbf16>
    %c0_7 = arith.constant 0 : index
    %c0_8 = arith.constant 0 : index
    %7 = vector.load %arg5[%c0_7, %c0_8] : memref<48x128xbf16, #tpu.memory_space<vmem>>, vector<48x128xbf16>
    %cst_9 = arith.constant dense<0.000000e+00> : vector<16x128xf32>
    %8 = tpu.matmul %6, %7, %cst_9 {dimension_numbers = #tpu.dot_dimension_numbers<[1], [0], [0], [1], [0, 0, 1, 1], [], []>} : vector<16x48xbf16>, vector<48x128xbf16>, vector<16x128xf32> -> vector<16x128xf32>
    %9 = vector.broadcast %0 : vector<1x128xf32> to vector<16x128xf32>
    %10 = arith.addf %8, %9 : vector<16x128xf32>
    %cst_10 = arith.constant 5.000000e-01 : f32
    %11 = vector.broadcast %cst_10 : f32 to vector<16x128xf32>
    %12 = arith.mulf %11, %5 : vector<16x128xf32>
    %cst_11 = arith.constant 4.471500e-02 : f32
    %13 = vector.broadcast %cst_11 : f32 to vector<16x128xf32>
    %14 = arith.mulf %13, %5 : vector<16x128xf32>
    %15 = arith.mulf %14, %5 : vector<16x128xf32>
    %16 = arith.mulf %15, %5 : vector<16x128xf32>
    %17 = arith.addf %5, %16 : vector<16x128xf32>
    %cst_12 = arith.constant 0.797884583 : f32
    %18 = vector.broadcast %cst_12 : f32 to vector<16x128xf32>
    %19 = arith.mulf %18, %17 : vector<16x128xf32>
    %20 = math.tanh %19 : vector<16x128xf32>
    %cst_13 = arith.constant 1.000000e+00 : f32
    %21 = vector.broadcast %cst_13 : f32 to vector<16x128xf32>
    %22 = arith.addf %21, %20 : vector<16x128xf32>
    %23 = arith.mulf %12, %22 : vector<16x128xf32>
    %24 = vector.shape_cast %23 : vector<16x128xf32> to vector<2x8x128xf32>
    %c0_14 = arith.constant 0 : index
    %c0_15 = arith.constant 0 : index
    %c0_16 = arith.constant 0 : index
    %25 = vector.load %arg7[%c0_14, %c0_15, %c0_16] : memref<2x16x128xf32, #tpu.memory_space<vmem>>, vector<2x8x128xf32>
    tpu.vector_store %arg7[%c0_14, %c0_15, %c0_16], %24 {strides = array<i32>} : memref<2x16x128xf32, #tpu.memory_space<vmem>>, vector<2x8x128xf32>,
    %cst_17 = arith.constant 5.000000e-01 : f32
    %26 = vector.broadcast %cst_17 : f32 to vector<16x128xf32>
    %27 = arith.mulf %26, %10 : vector<16x128xf32>
    %cst_18 = arith.constant 4.471500e-02 : f32
    %28 = vector.broadcast %cst_18 : f32 to vector<16x128xf32>
    %29 = arith.mulf %28, %10 : vector<16x128xf32>
    %30 = arith.mulf %29, %10 : vector<16x128xf32>
    %31 = arith.mulf %30, %10 : vector<16x128xf32>
    %32 = arith.addf %10, %31 : vector<16x128xf32>
    %cst_19 = arith.constant 0.797884583 : f32
    %33 = vector.broadcast %cst_19 : f32 to vector<16x128xf32>
    %34 = arith.mulf %33, %32 : vector<16x128xf32>
    %35 = math.tanh %34 : vector<16x128xf32>
    %cst_20 = arith.constant 1.000000e+00 : f32
    %36 = vector.broadcast %cst_20 : f32 to vector<16x128xf32>
    %37 = arith.addf %36, %35 : vector<16x128xf32>
    %38 = arith.mulf %27, %37 : vector<16x128xf32>
    %39 = vector.shape_cast %38 : vector<16x128xf32> to vector<2x8x128xf32>
    %c0_21 = arith.constant 0 : index
    %c8 = arith.constant 8 : index
    %c0_22 = arith.constant 0 : index
    %40 = vector.load %arg7[%c0_21, %c8, %c0_22] : memref<2x16x128xf32, #tpu.memory_space<vmem>>, vector<2x8x128xf32>
    tpu.vector_store %arg7[%c0_21, %c8, %c0_22], %39 {strides = array<i32>} : memref<2x16x128xf32, #tpu.memory_space<vmem>>, vector<2x8x128xf32>,
    return
  }
  func.func @transform_0(%arg0: i32, %arg1: i32) -> (i32, i32) {
    %c0_i32 = arith.constant 0 : i32
    %c0_i32_0 = arith.constant 0 : i32
    return %arg0, %c0_i32 : i32, i32
  }
  func.func @transform_1(%arg0: i32, %arg1: i32) -> (i32, i32) {
    %c0_i32 = arith.constant 0 : i32
    %c0_i32_0 = arith.constant 0 : i32
    return %arg0, %c0_i32 : i32, i32
  }
  func.func @transform_2(%arg0: i32, %arg1: i32) -> (i32, i32) {
    %c0_i32 = arith.constant 0 : i32
    %c0_i32_0 = arith.constant 0 : i32
    return %c0_i32, %arg1 : i32, i32
  }
  func.func @transform_3(%arg0: i32, %arg1: i32) -> (i32, i32) {
    %c0_i32 = arith.constant 0 : i32
    %c0_i32_0 = arith.constant 0 : i32
    return %c0_i32, %arg1 : i32, i32
  }
  func.func @transform_4(%arg0: i32, %arg1: i32) -> (i32, i32) {
    %c0_i32 = arith.constant 0 : i32
    %c0_i32_0 = arith.constant 0 : i32
    return %c0_i32, %arg1 : i32, i32
  }
  func.func @transform_5(%arg0: i32, %arg1: i32) -> (i32, i32, i32) {
    %c0_i32 = arith.constant 0 : i32
    %c0_i32_0 = arith.constant 0 : i32
    return %arg0, %c0_i32, %arg1 : i32, i32, i32
  }
}

</mosaic_0001>

<llo_original>
// kernel: tpu_custom_call.1
$region0: #{tpu_custom_call.1}
  #allocation0 [shape = 'u32[]', space=smem, size = 0x4, offset = 0x4, fixed_abs, tag = 'smem constant byte address 0x4 - core index']
  #allocation1 [shape = 'u32[144,128]{1,0:T(1,128)}', space=vmem, size = 0x12000, scoped, tag = 'internal scratch']
  %s0 = inlined_call_operand.hbm [shape: bf16[16,16], index: 0, kind: input, shape index: {}]
  %s1 = inlined_call_operand.hbm [shape: bf16[16,48], index: 1, kind: input, shape index: {}]
  %s2 = inlined_call_operand.hbm [shape: bf16[16,128], index: 2, kind: input, shape index: {}]
  %s3 = inlined_call_operand.hbm [shape: bf16[48,128], index: 3, kind: input, shape index: {}]
  %s4 = inlined_call_operand.vmem [shape: f32[1,128], index: 4, kind: input, shape index: {}]
  %s5 = inlined_call_operand.hbm [shape: f32[2,16,128], index: 5, kind: output, shape index: {}]
  %s6 = sld [smem:[#allocation0]]
  $region46: #{tpu_custom_call.1} parent=0
    _
  %s8 = ssub.s32 1, %s6
  %s9 = scalar_select 0, %s8, %s6
  $region1: #{tpu_custom_call.1} parent=0
    #allocation2 [shape = 'u8[4096]{0}', space=vmem, size = 0x1000, scoped, tag = 'input window, operand 0, single buffered']
    #allocation3 [shape = 's32[1]{0}', space=sflag, size = 0x4, scoped, tag = 'scoped memory for tpu_custom_call.1']
    #allocation4 [shape = 's32[1]{0}', space=sflag, size = 0x4, scoped, tag = 'scoped memory for tpu_custom_call.1']
    #allocation5 [shape = 'u8[4096]{0}', space=vmem, size = 0x1000, scoped, tag = 'input window, operand 1, single buffered']
    #allocation6 [shape = 's32[1]{0}', space=sflag, size = 0x4, scoped, tag = 'scoped memory for tpu_custom_call.1']
    #allocation7 [shape = 'u8[4096]{0}', space=vmem, size = 0x1000, scoped, tag = 'input window, operand 2, single buffered']
    #allocation8 [shape = 'u8[12288]{0}', space=vmem, size = 0x3000, scoped, tag = 'input window, operand 3, single buffered']
    #allocation9 [shape = 's32[1]{0}', space=sflag, size = 0x4, scoped, tag = 'scoped memory for tpu_custom_call.1']
    #allocation10 [shape = 'u8[16384]{0}', space=vmem, size = 0x4000, scoped, tag = 'output window, operand 0, single buffered']
    %10 = vsyncpa [#allocation3], 0
    %11 = vsyncpa [#allocation6], 0
    %12 = vsyncpa [#allocation9], 0
    %13 = vsyncpa [#allocation4], 0
    // Predicated region
    $region2: #{tpu_custom_call.1} parent=1 // pred_check
      _
    $region3: #{tpu_custom_call.1} parent=1 // pred_check_branch
      %15 = sbr.rel (0) target = $region5
    $region4: #{tpu_custom_call.1} parent=1 // pred_region
      %s17 = ssub.s32 128, 128
      %18 = vsyncadd [#allocation3], %s17
      %s19 = sshll.u32 [#allocation2], 4
      %s20 = int_to_ptr.vmem [resolvable:$true] %s19
      %25 = dma.hbm_to_vmem [thread:$0]  %s0, 128, %s20, [#allocation3], 64, 64, 4
    $region5: #{tpu_custom_call.1} parent=1 // pred_fallthru
      _
    // Predicated region
    $region6: #{tpu_custom_call.1} parent=1 // pred_check
      _
    $region7: #{tpu_custom_call.1} parent=1 // pred_check_branch
      %27 = sbr.rel (0) target = $region9
    $region8: #{tpu_custom_call.1} parent=1 // pred_region
      %s29 = ssub.s32 128, 128
      %30 = vsyncadd [#allocation6], %s29
      %s31 = sshll.u32 [#allocation5], 4
      %s32 = int_to_ptr.vmem [resolvable:$true] %s31
      %37 = dma.hbm_to_vmem [thread:$0]  %s1, 128, %s32, [#allocation6], 64, 64, 4
    $region9: #{tpu_custom_call.1} parent=1 // pred_fallthru
      _
    // Predicated region
    $region10: #{tpu_custom_call.1} parent=1 // pred_check
      _
    $region11: #{tpu_custom_call.1} parent=1 // pred_check_branch
      %39 = sbr.rel (0) target = $region13
    $region12: #{tpu_custom_call.1} parent=1 // pred_region
      %s41 = ssub.s32 128, 128
      %42 = vsyncadd [#allocation6], %s41
      %s43 = sshll.u32 [#allocation7], 4
      %s44 = int_to_ptr.vmem [resolvable:$true] %s43
      %49 = dma.hbm_to_vmem [thread:$0]  %s2, 128, %s44, [#allocation6], 64, 64, 4
    $region13: #{tpu_custom_call.1} parent=1 // pred_fallthru
      _
    // Predicated region
    $region14: #{tpu_custom_call.1} parent=1 // pred_check
      _
    $region15: #{tpu_custom_call.1} parent=1 // pred_check_branch
      %51 = sbr.rel (0) target = $region17
    $region16: #{tpu_custom_call.1} parent=1 // pred_region
      %s53 = ssub.s32 384, 384
      %54 = vsyncadd [#allocation9], %s53
      %s55 = sshll.u32 [#allocation8], 4
      %s56 = int_to_ptr.vmem [resolvable:$true] %s55
      %61 = dma.hbm_to_vmem [thread:$0]  %s3, 384, %s56, [#allocation9], 64, 64, 4
    $region17: #{tpu_custom_call.1} parent=1 // pred_fallthru
      _
    // Predicated region
    $region18: #{tpu_custom_call.1} parent=1 // pred_check
      _
    $region19: #{tpu_custom_call.1} parent=1 // pred_check_branch
      %63 = sbr.rel (0) target = $region21
    $region20: #{tpu_custom_call.1} parent=1 // pred_region
      _
    $region21: #{tpu_custom_call.1} parent=1 // pred_fallthru
      _
    // Predicated region
    $region22: #{tpu_custom_call.1} parent=1 // pred_check
      _
    $region23: #{tpu_custom_call.1} parent=1 // pred_check_branch
      %65 = sbr.rel (0) target = $region25
    $region24: #{tpu_custom_call.1} parent=1 // pred_region
      %66 = dma.done [#allocation3], 128
    $region25: #{tpu_custom_call.1} parent=1 // pred_fallthru
      _
    // Predicated region
    $region26: #{tpu_custom_call.1} parent=1 // pred_check
      _
    $region27: #{tpu_custom_call.1} parent=1 // pred_check_branch
      %68 = sbr.rel (0) target = $region29
    $region28: #{tpu_custom_call.1} parent=1 // pred_region
      %69 = dma.done [#allocation6], 128
    $region29: #{tpu_custom_call.1} parent=1 // pred_fallthru
      _
    // Predicated region
    $region30: #{tpu_custom_call.1} parent=1 // pred_check
      _
    $region31: #{tpu_custom_call.1} parent=1 // pred_check_branch
      %71 = sbr.rel (0) target = $region33
    $region32: #{tpu_custom_call.1} parent=1 // pred_region
      %72 = dma.done [#allocation6], 128
    $region33: #{tpu_custom_call.1} parent=1 // pred_fallthru
      _
    // Predicated region
    $region34: #{tpu_custom_call.1} parent=1 // pred_check
      _
    $region35: #{tpu_custom_call.1} parent=1 // pred_check_branch
      %74 = sbr.rel (0) target = $region37
    $region36: #{tpu_custom_call.1} parent=1 // pred_region
      %75 = dma.done [#allocation9], 384
    $region37: #{tpu_custom_call.1} parent=1 // pred_fallthru
      _
    %v77 = vld [vmem:[%s4] sm:$0x1]
    %v78 = vld [vmem:[#allocation2] sm:$0xf]
    %v79 = vld [vmem:[#allocation2 + $0x4] sm:$0xf]
    %v80 = vld [vmem:[#allocation7] sm:$0xf]
    %v81 = vld [vmem:[#allocation7 + $0x4] sm:$0xf]
    %v83 = vlaneseq
    %v84 = vshrl.u32 %v83, 7
    %v85 = vsub.s32 0, %v84
    %v86 = vrot.slane %v77, %v85
    %v90 = vunpack.c.l.b16 %v78
    %v91 = vunpack.c.l.b16 %v79
    %v92 = vpack.c.b16 %v91, %v90
    %v95 = vunpack.c.l.b16 %v80
    %v96 = vunpack.c.l.b16 %v81
    %v97 = vpack.c.b16 %v96, %v95
    %vm99 = vcmask 130048
    %v101 = vsel %vm99, %v92, 0
    %103 = vmatprep.subr.bf16.mxu0 0
    %104 = vmatpush1.bf16.msra.mxu0 0
    %105 = vmatprep.subr.bf16.mxu0 0
    %106 = vmatpush1.bf16.msra.mxu0 0
    %107 = vmatprep.subr.bf16.mxu0 0
    %108 = vmatpush1.bf16.msra.mxu0 0
    %109 = vmatprep.subr.bf16.mxu0 0
    %110 = vmatpush1.bf16.msra.mxu0 0
    %111 = vmatprep.subr.bf16.mxu0 0
    %112 = vmatpush1.bf16.msra.mxu0 0
    %113 = vmatprep.subr.bf16.mxu0 0
    %114 = vmatpush1.bf16.msra.mxu0 0
    %115 = vmatprep.subr.bf16.mxu0 0
    %116 = vmatpush1.bf16.msra.mxu0 0
    %117 = vmatprep.subr.bf16.mxu0 0
    %118 = vmatpush1.bf16.msra.mxu0 %v97
    %119 = vmatprep.subr.bf16.mxu0 0
    %120 = vmatpush2.bf16.msra.mxu0 0
    %121 = vmatprep.subr.bf16.mxu0 0
    %122 = vmatpush2.bf16.msra.mxu0 0
    %123 = vmatprep.subr.bf16.mxu0 0
    %124 = vmatpush2.bf16.msra.mxu0 0
    %125 = vmatprep.subr.bf16.mxu0 0
    %126 = vmatpush2.bf16.msra.mxu0 0
    %127 = vmatprep.subr.bf16.mxu0 0
    %128 = vmatpush2.bf16.msra.mxu0 0
    %129 = vmatprep.subr.bf16.mxu0 0
    %130 = vmatpush2.bf16.msra.mxu0 0
    %131 = vmatprep.subr.bf16.mxu0 0
    %132 = vmatpush2.bf16.msra.mxu0 0
    %133 = vmatprep.subr.bf16.mxu0 0
    %134 = vmatpush2.bf16.msra.mxu0 0
    %135 = vmatprep.mubr.bf16.mxu0 0
    %136 = vmatmul.mubr.bf16.gmra.mxu0 %v101
    %v137 = vpop.f32.mrf.mxu0
    %v138 = vadd.f32 %v86, %v137
    %v139 = vpop.f32.mrf.mxu0
    %v140 = vpop.f32.mrf.mxu0
    %v141 = vadd.f32 %v86, %v140
    %v142 = vpop.f32.mrf.mxu0
    %143 = vdwg.mxu0
    %v144 = vld [vmem:[#allocation5] sm:$0xf]
    %v145 = vld [vmem:[#allocation5 + $0x4] sm:$0xf]
    %v146 = vld [vmem:[#allocation8] sm:$0xf]
    %v147 = vld [vmem:[#allocation8 + $0x4] sm:$0xf]
    %v148 = vld [vmem:[#allocation8 + $0x8] sm:$0xf]
    %v149 = vld [vmem:[#allocation8 + $0xc] sm:$0xf]
    %v150 = vld [vmem:[#allocation8 + $0x10] sm:$0xf]
    %v151 = vld [vmem:[#allocation8 + $0x14] sm:$0xf]
    %v154 = vunpack.c.l.b16 %v144
    %v155 = vunpack.c.l.b16 %v145
    %v156 = vpack.c.b16 %v155, %v154
    %v163 = vunpack.c.l.b16 %v146
    %v164 = vunpack.c.l.b16 %v147
    %v165 = vunpack.c.l.b16 %v148
    %v166 = vunpack.c.l.b16 %v149
    %v167 = vunpack.c.l.b16 %v150
    %v168 = vunpack.c.l.b16 %v151
    %v169 = vpack.c.b16 %v164, %v163
    %v170 = vpack.c.b16 %v166, %v165
    %v171 = vpack.c.b16 %v168, %v167
    %vm175 = vcmask 392192
    %v177 = vsel %vm175, %v156, 0
    %179 = vmatprep.subr.bf16.mxu0 0
    %180 = vmatpush1.bf16.msra.mxu0 0
    %181 = vmatprep.subr.bf16.mxu0 0
    %182 = vmatpush1.bf16.msra.mxu0 0
    %183 = vmatprep.subr.bf16.mxu0 0
    %184 = vmatpush1.bf16.msra.mxu0 0
    %185 = vmatprep.subr.bf16.mxu0 0
    %186 = vmatpush1.bf16.msra.mxu0 0
    %187 = vmatprep.subr.bf16.mxu0 0
    %188 = vmatpush1.bf16.msra.mxu0 0
    %189 = vmatprep.subr.bf16.mxu0 0
    %190 = vmatpush1.bf16.msra.mxu0 %v171
    %191 = vmatprep.subr.bf16.mxu0 0
    %192 = vmatpush1.bf16.msra.mxu0 %v170
    %193 = vmatprep.subr.bf16.mxu0 0
    %194 = vmatpush1.bf16.msra.mxu0 %v169
    %195 = vmatprep.subr.bf16.mxu0 0
    %196 = vmatpush2.bf16.msra.mxu0 0
    %197 = vmatprep.subr.bf16.mxu0 0
    %198 = vmatpush2.bf16.msra.mxu0 0
    %199 = vmatprep.subr.bf16.mxu0 0
    %200 = vmatpush2.bf16.msra.mxu0 0
    %201 = vmatprep.subr.bf16.mxu0 0
    %202 = vmatpush2.bf16.msra.mxu0 0
    %203 = vmatprep.subr.bf16.mxu0 0
    %204 = vmatpush2.bf16.msra.mxu0 0
    %205 = vmatprep.subr.bf16.mxu0 0
    %206 = vmatpush2.bf16.msra.mxu0 0
    %207 = vmatprep.subr.bf16.mxu0 0
    %208 = vmatpush2.bf16.msra.mxu0 0
    %209 = vmatprep.subr.bf16.mxu0 0
    %210 = vmatpush2.bf16.msra.mxu0 0
    %211 = vmatprep.mubr.bf16.mxu0 0
    %212 = vmatmul.mubr.bf16.gmra.mxu0 %v177
    %v213 = vpop.f32.mrf.mxu0
    %v214 = vadd.f32 %v86, %v213
    %v215 = vpop.f32.mrf.mxu0
    %v216 = vpop.f32.mrf.mxu0
    %v217 = vadd.f32 %v86, %v216
    %v218 = vpop.f32.mrf.mxu0
    %219 = vdwg.mxu0
    %v220 = vmul.f32 %v138, 0.5
    %v221 = vmul.f32 %v141, 0.5
    %v222 = vmul.f32 %v138, 0.044715
    %v223 = vmul.f32 %v141, 0.044715
    %v224 = vmul.f32 %v222, %v138
    %v225 = vmul.f32 %v223, %v141
    %v226 = vmul.f32 %v224, %v138
    %v227 = vmul.f32 %v225, %v141
    %v228 = vadd.f32 %v138, %v226
    %v229 = vadd.f32 %v141, %v227
    %v230 = vmul.f32 %v228, 0.7978846
    %v231 = vmul.f32 %v229, 0.7978846
    %v232 = vtanh.pop %v230
    %v233 = vtanh.pop %v231
    %v234 = vadd.f32 %v232, 1.0
    %v235 = vadd.f32 %v233, 1.0
    %v236 = vmul.f32 %v220, %v234
    %v237 = vmul.f32 %v221, %v235
    %238 = vst [vmem:[#allocation10] sm:$0xff] %v236
    %239 = vst [vmem:[#allocation10 + $0x10] sm:$0xff] %v237
    %v240 = vmul.f32 %v214, 0.5
    %v241 = vmul.f32 %v217, 0.5
    %v242 = vmul.f32 %v214, 0.044715
    %v243 = vmul.f32 %v217, 0.044715
    %v244 = vmul.f32 %v242, %v214
    %v245 = vmul.f32 %v243, %v217
    %v246 = vmul.f32 %v244, %v214
    %v247 = vmul.f32 %v245, %v217
    %v248 = vadd.f32 %v214, %v246
    %v249 = vadd.f32 %v217, %v247
    %v250 = vmul.f32 %v248, 0.7978846
    %v251 = vmul.f32 %v249, 0.7978846
    %v252 = vtanh.pop %v250
    %v253 = vtanh.pop %v251
    %v254 = vadd.f32 %v252, 1.0
    %v255 = vadd.f32 %v253, 1.0
    %v256 = vmul.f32 %v240, %v254
    %v257 = vmul.f32 %v241, %v255
    %258 = vst [vmem:[#allocation10 + $0x8] sm:$0xff] %v256
    %259 = vst [vmem:[#allocation10 + $0x18] sm:$0xff] %v257
    // Predicated region
    $region38: #{tpu_custom_call.1} parent=1 // pred_check
      _
    $region39: #{tpu_custom_call.1} parent=1 // pred_check_branch
      %261 = sbr.rel (0) target = $region41
    $region40: #{tpu_custom_call.1} parent=1 // pred_region
      %s263 = ssub.s32 512, 512
      %264 = vsyncadd [#allocation4], %s263
      %s265 = sshll.u32 [#allocation10], 4
      %s266 = int_to_ptr.vmem [resolvable:$true] %s265
      %271 = dma.vmem_to_hbm [thread:$0]  %s266, 512, %s5, [#allocation4], 128, 128, 8
    $region41: #{tpu_custom_call.1} parent=1 // pred_fallthru
      _
    // Predicated region
    $region42: #{tpu_custom_call.1} parent=1 // pred_check
      _
    $region43: #{tpu_custom_call.1} parent=1 // pred_check_branch
      %273 = sbr.rel (0) target = $region45
    $region44: #{tpu_custom_call.1} parent=1 // pred_region
      %274 = dma.done [#allocation4], 512
    $region45: #{tpu_custom_call.1} parent=1 // pred_fallthru
      _
    %275 = vsyncpa [#allocation3], 1
    %276 = vsyncpa [#allocation6], 1
    %277 = vsyncpa [#allocation9], 1
    %278 = vsyncpa [#allocation4], 1

</llo_original>
